<compile_context>
chip_gen: v5e
topology: v5e:2x2
jax: 0.10.0
libtpu: 0.0.40
codegen_flags: <defaults>
</compile_context>

<pallas_src>
import functools
import math

import jax
import jax.numpy as jnp
from jax.experimental import pallas as pl
from jax.experimental.pallas import tpu as pltpu


def _round_up(x, n):
    return (x + n - 1) // n * n


def _states_actions_encoder_kernel(obs_ref, act_ref, w_obs_ref, w_act_ref, b_ref, o_ref):
    # obs_ref: (TM, G*K_obs)    act_ref: (TM, G*K_act)
    # w_obs:   (G*K_obs, G*H)   w_act:   (G*K_act, G*H)   b_ref: (1, G*H)
    # o_ref:   (TM, G*H)
    y = jnp.dot(obs_ref[...], w_obs_ref[...], preferred_element_type=jnp.float32)
    y = y + jnp.dot(act_ref[...], w_act_ref[...], preferred_element_type=jnp.float32)
    y = y + b_ref[...].astype(jnp.float32)          # broadcast (1, G*H) -> (TM, G*H)
    # LeakyReLU, default negative_slope = 0.01 (matches nn.LeakyReLU()).
    y = jnp.where(y >= 0.0, y, 0.01 * y)
    o_ref[...] = y.astype(o_ref.dtype)


def _block_diag(w_kh, g):
    """(K, H) -> block-diagonal (g*K, g*H): out[i*K+k, j*H+h] = (i==j) * w[k, h]."""
    if g == 1:
        return w_kh
    k, h = w_kh.shape
    eye = jnp.eye(g, dtype=w_kh.dtype)
    return jnp.einsum("ij,kh->ikjh", eye, w_kh).reshape(g * k, g * h)


def states_actions_encoder_forward(observation, action, weight, bias, *,
                                   tile_m=4096, input_dtype=None):
    """
    observation: (S, E, A, A-1, K_obs)
    action:      (S, E, A, A-1, K_act)
    weight:      (H_out, K_obs + K_act)   -- PyTorch nn.Linear layout
    bias:        (H_out,)
    input_dtype: optional streaming dtype (e.g. jnp.bfloat16 on v5e); accumulation
                 stays f32 in-kernel, output keeps observation's original dtype.
    returns      (S, E, A, A-1, H_out)
    """
    *lead, k_obs = observation.shape
    k_act = action.shape[-1]
    h_out, k_tot = weight.shape
    assert k_tot == k_obs + k_act
    m = math.prod(lead)
    out_dtype = observation.dtype

    # TODO(synk): dropout_rate > 0.0 path (nn.Dropout) is not implemented; the
    # default StatesActionsEncoder uses dropout_rate=0.0 so it is a no-op here.

    if input_dtype is not None:
        observation = observation.astype(input_dtype)
        action = action.astype(input_dtype)
        weight = weight.astype(input_dtype)
        bias = bias.astype(input_dtype)

    # One-time XLA-side weight prep (hoisted out of the kernel): split + transpose.
    w_obs = weight[:, :k_obs].T          # (K_obs, H)
    w_act = weight[:, k_obs:].T          # (K_act, H)

    # Row-packing factor G: make G*H_out a multiple of 128 so output stores are
    # lane-dense (unmasked).  G=1 when H_out is already lane-dense.
    g = 1
    if h_out % 128 != 0:
        g = 8
        while (g * h_out) % 128 != 0 and g < 64:
            g *= 2

    w_obs_p = _block_diag(w_obs, g)                       # (G*K_obs, G*H)
    w_act_p = _block_diag(w_act, g)                       # (G*K_act, G*H)
    b_p = jnp.tile(bias.reshape(1, h_out), (1, g))        # (1, G*H)
    gh = g * h_out

    obs2d = observation.reshape(m, k_obs)
    act2d = action.reshape(m, k_act)
    m_pad = _round_up(m, g)
    if m_pad != m:
        pad = m_pad - m
        obs2d = jnp.pad(obs2d, ((0, pad), (0, 0)))
        act2d = jnp.pad(act2d, ((0, pad), (0, 0)))
    m_rows = m_pad // g
    obs_p = obs2d.reshape(m_rows, g * k_obs)               # contiguous, free
    act_p = act2d.reshape(m_rows, g * k_act)

    # ---- row tile selection -------------------------------------------------
    tile_m = max(8, _round_up(int(tile_m), 8))
    tm = min(tile_m, m_rows)
    # Keep >= 2 grid steps when there is enough work so the "parallel" axis can
    # shard across v7x's two TensorCores.
    if m_rows >= 1024 and pl.cdiv(m_rows, tm) < 2:
        tm = _round_up(pl.cdiv(m_rows, 2), 8)

    def _blk_bytes(rows, cols, dtype):
        return (_round_up(max(int(rows), 1), 8)
                * _round_up(max(int(cols), 1), 128)
                * jnp.dtype(dtype).itemsize)

    # Weights/bias are VMEM-resident across the grid; count them conservatively
    # double-buffered too.
    w_bytes = 2 * (_blk_bytes(g * k_obs, gh, w_obs_p.dtype)
                   + _blk_bytes(g * k_act, gh, w_act_p.dtype)
                   + _blk_bytes(1, gh, b_p.dtype))

    vmem_budget = 44 * 1024 * 1024      # safe on v7x's 64 MiB per-TC VMEM
    while True:
        need = (2 * (_blk_bytes(tm, g * k_obs, obs_p.dtype)
                     + _blk_bytes(tm, g * k_act, act_p.dtype)
                     + _blk_bytes(tm, gh, out_dtype))
                + w_bytes)
        if need <= vmem_budget or tm <= 512:
            break
        tm = max(8, _round_up(tm // 2, 8))

    grid = (pl.cdiv(m_rows, tm),)
    vmem_limit = int(min(max(need + (4 << 20), 16 << 20), 48 << 20))

    in_item = jnp.dtype(obs_p.dtype).itemsize
    out_item = jnp.dtype(out_dtype).itemsize
    w_item = jnp.dtype(w_obs_p.dtype).itemsize
    cost = pl.CostEstimate(
        flops=2 * m_rows * (g * k_tot) * gh,
        bytes_accessed=(in_item * (m_rows * g * k_obs + m_rows * g * k_act)
                        + out_item * m_rows * gh
                        + w_item * (g * k_obs * gh + g * k_act * gh + gh)),
        transcendentals=0,
    )

    out_p = pl.pallas_call(
        _states_actions_encoder_kernel,
        out_shape=jax.ShapeDtypeStruct((m_rows, gh), out_dtype),
        grid_spec=pltpu.PrefetchScalarGridSpec(
            num_scalar_prefetch=0,
            grid=grid,
            in_specs=[
                pl.BlockSpec((tm, g * k_obs), lambda i: (i, 0)),
                pl.BlockSpec((tm, g * k_act), lambda i: (i, 0)),
                pl.BlockSpec((g * k_obs, gh), lambda i: (0, 0)),   # VMEM-resident
                pl.BlockSpec((g * k_act, gh), lambda i: (0, 0)),   # VMEM-resident
                pl.BlockSpec((1, gh), lambda i: (0, 0)),           # VMEM-resident
            ],
            out_specs=pl.BlockSpec((tm, gh), lambda i: (i, 0)),
        ),
        compiler_params=pltpu.CompilerParams(
            dimension_semantics=("parallel",),      # megacore-shardable on v7x
            vmem_limit_bytes=vmem_limit,
        ),
        cost_estimate=cost,
    )(obs_p, act_p, w_obs_p, w_act_p, b_p)

    out2d = out_p.reshape(m_pad, h_out)[:m]         # contiguous unpack, drop row padding
    return out2d.reshape(*lead, h_out)


def _reference_forward(observation, action, weight, bias):
    x = jnp.concatenate([observation, action], axis=-1)
    y = jnp.einsum("...k,hk->...h", x, weight) + bias
    return jnp.where(y >= 0.0, y, 0.01 * y)


def _make_params(key, h_out, fan_in, dtype=jnp.float32):
    kw, kb = jax.random.split(key)
    # PyTorch init.kaiming_normal_ default: fan_in mode, a=0 -> std = sqrt(2/fan_in)
    weight = jnp.sqrt(2.0 / fan_in) * jax.random.normal(kw, (h_out, fan_in), dtype=dtype)
    bound = 1.0 / math.sqrt(fan_in)
    bias = jax.random.uniform(kb, (h_out,), minval=-bound, maxval=bound, dtype=dtype)
    return weight, bias


if __name__ == "__main__":
    key = jax.random.PRNGKey(0)
    k0, k1, k2, k3, k4 = jax.random.split(key, 5)

    # Small shapes consistent with (S, E, A, A-1, *)
    steps, env, agents = 2, 2, 3
    groupmates = agents - 1
    state_dim, action_dim, hidden = 16, 4, 32

    observation = jax.random.normal(
        k0, (steps, env, agents, groupmates, state_dim), dtype=jnp.float32)
    action = jax.random.normal(
        k1, (steps, env, agents, groupmates, action_dim), dtype=jnp.float32)
    weight, bias = _make_params(k2, hidden, state_dim + action_dim)

    out = states_actions_encoder_forward(observation, action, weight, bias)
    out = jax.block_until_ready(out)
    ref = _reference_forward(observation, action, weight, bias)
    assert out.shape == (steps, env, agents, groupmates, hidden)
    assert jnp.allclose(out, ref, atol=1e-5, rtol=1e-5), "mismatch vs reference"

    # Second check: ragged M (not a multiple of the packing factor) and a forced
    # multi-step grid with a ragged trailing tile.
    steps2, env2, agents2 = 5, 3, 3
    groupmates2 = agents2 - 1
    observation2 = jax.random.normal(
        k3, (steps2, env2, agents2, groupmates2, state_dim), dtype=jnp.float32)
    action2 = jax.random.normal(
        k4, (steps2, env2, agents2, groupmates2, action_dim), dtype=jnp.float32)

    out2 = states_actions_encoder_forward(observation2, action2, weight, bias, tile_m=8)
    out2 = jax.block_until_ready(out2)
    ref2 = _reference_forward(observation2, action2, weight, bias)
    assert out2.shape == (steps2, env2, agents2, groupmates2, hidden)
    assert jnp.allclose(out2, ref2, atol=1e-5, rtol=1e-5), "mismatch vs reference (ragged M)"

    print("KERNEL_OK")
</pallas_src>

<mosaic_0001>
module attributes {stable_mosaic.version = 11 : i64} {
  func.func @_states_actions_encoder_kernel(%arg0: i32, %arg1: memref<3x128xf32, #tpu.memory_space<vmem>>, %arg2: memref<3x32xf32, #tpu.memory_space<vmem>>, %arg3: memref<128x256xf32, #tpu.memory_space<vmem>>, %arg4: memref<32x256xf32, #tpu.memory_space<vmem>>, %arg5: memref<1x256xf32, #tpu.memory_space<vmem>>, %arg6: memref<3x256xf32, #tpu.memory_space<vmem>>) attributes {dimension_semantics = [#tpu.dimension_semantics<parallel>], iteration_bounds = array<i64: 1>, scalar_prefetch = 0 : i64, scratch_operands = 0 : i64, tpu.core_type = #tpu.core_type<tc>, window_params = [{transform_indices = @transform_0, window_bounds = array<i64: 3, 128>}, {transform_indices = @transform_1, window_bounds = array<i64: 3, 32>}, {pipeline_mode = #tpu.pipeline_mode<synchronous>, transform_indices = @transform_2, window_bounds = array<i64: 128, 256>}, {pipeline_mode = #tpu.pipeline_mode<synchronous>, transform_indices = @transform_3, window_bounds = array<i64: 32, 256>}, {pipeline_mode = #tpu.pipeline_mode<synchronous>, transform_indices = @transform_4, window_bounds = array<i64: 1, 256>}, {transform_indices = @transform_5, window_bounds = array<i64: 3, 256>}]} {
    %c0 = arith.constant 0 : index
    %c0_0 = arith.constant 0 : index
    %0 = vector.load %arg1[%c0, %c0_0] : memref<3x128xf32, #tpu.memory_space<vmem>>, vector<3x128xf32>
    %c0_1 = arith.constant 0 : index
    %c0_2 = arith.constant 0 : index
    %1 = vector.load %arg3[%c0_1, %c0_2] : memref<128x256xf32, #tpu.memory_space<vmem>>, vector<128x256xf32>
    %cst = arith.constant dense<0.000000e+00> : vector<3x256xf32>
    %2 = tpu.matmul %0, %1, %cst {dimension_numbers = #tpu.dot_dimension_numbers<[1], [0], [0], [1], [0, 0, 1, 1], [], []>} : vector<3x128xf32>, vector<128x256xf32>, vector<3x256xf32> -> vector<3x256xf32>
    %c0_3 = arith.constant 0 : index
    %c0_4 = arith.constant 0 : index
    %3 = vector.load %arg2[%c0_3, %c0_4] : memref<3x32xf32, #tpu.memory_space<vmem>>, vector<3x32xf32>
    %c0_5 = arith.constant 0 : index
    %c0_6 = arith.constant 0 : index
    %4 = vector.load %arg4[%c0_5, %c0_6] : memref<32x256xf32, #tpu.memory_space<vmem>>, vector<32x256xf32>
    %cst_7 = arith.constant dense<0.000000e+00> : vector<3x256xf32>
    %5 = tpu.matmul %3, %4, %cst_7 {dimension_numbers = #tpu.dot_dimension_numbers<[1], [0], [0], [1], [0, 0, 1, 1], [], []>} : vector<3x32xf32>, vector<32x256xf32>, vector<3x256xf32> -> vector<3x256xf32>
    %6 = arith.addf %2, %5 : vector<3x256xf32>
    %c0_8 = arith.constant 0 : index
    %c0_9 = arith.constant 0 : index
    %7 = vector.load %arg5[%c0_8, %c0_9] : memref<1x256xf32, #tpu.memory_space<vmem>>, vector<1x256xf32>
    %8 = vector.broadcast %7 : vector<1x256xf32> to vector<3x256xf32>
    %9 = arith.addf %6, %8 : vector<3x256xf32>
    %cst_10 = arith.constant 0.000000e+00 : f32
    %10 = vector.broadcast %cst_10 : f32 to vector<3x256xf32>
    %11 = arith.cmpf oge, %9, %10 : vector<3x256xf32>
    %cst_11 = arith.constant 0.00999999977 : f32
    %12 = vector.broadcast %cst_11 : f32 to vector<3x256xf32>
    %13 = arith.mulf %12, %9 : vector<3x256xf32>
    %14 = arith.select %11, %9, %13 : vector<3x256xi1>, vector<3x256xf32>
    %c0_12 = arith.constant 0 : index
    %c0_13 = arith.constant 0 : index
    %15 = vector.load %arg6[%c0_12, %c0_13] : memref<3x256xf32, #tpu.memory_space<vmem>>, vector<3x256xf32>
    tpu.vector_store %arg6[%c0_12, %c0_13], %14 {strides = array<i32>} : memref<3x256xf32, #tpu.memory_space<vmem>>, vector<3x256xf32>,
    return
  }
  func.func @transform_0(%arg0: i32) -> (i32, i32) {
    %c0_i32 = arith.constant 0 : i32
    %c0_i32_0 = arith.constant 0 : i32
    return %arg0, %c0_i32 : i32, i32
  }
  func.func @transform_1(%arg0: i32) -> (i32, i32) {
    %c0_i32 = arith.constant 0 : i32
    %c0_i32_0 = arith.constant 0 : i32
    return %arg0, %c0_i32 : i32, i32
  }
  func.func @transform_2(%arg0: i32) -> (i32, i32) {
    %c0_i32 = arith.constant 0 : i32
    %c0_i32_0 = arith.constant 0 : i32
    %c0_i32_1 = arith.constant 0 : i32
    return %c0_i32, %c0_i32_0 : i32, i32
  }
  func.func @transform_3(%arg0: i32) -> (i32, i32) {
    %c0_i32 = arith.constant 0 : i32
    %c0_i32_0 = arith.constant 0 : i32
    %c0_i32_1 = arith.constant 0 : i32
    return %c0_i32, %c0_i32_0 : i32, i32
  }
  func.func @transform_4(%arg0: i32) -> (i32, i32) {
    %c0_i32 = arith.constant 0 : i32
    %c0_i32_0 = arith.constant 0 : i32
    %c0_i32_1 = arith.constant 0 : i32
    return %c0_i32, %c0_i32_0 : i32, i32
  }
  func.func @transform_5(%arg0: i32) -> (i32, i32) {
    %c0_i32 = arith.constant 0 : i32
    %c0_i32_0 = arith.constant 0 : i32
    return %arg0, %c0_i32 : i32, i32
  }
}

</mosaic_0001>

<llo_original>
// kernel: tpu_custom_call.1
$region0: #{tpu_custom_call.1}
  #allocation0 [shape = 'u32[]', space=smem, size = 0x4, offset = 0x4, fixed_abs, tag = 'smem constant byte address 0x4 - core index']
  #allocation1 [shape = 'u32[72,128]{1,0:T(1,128)}', space=vmem, size = 0x9000, scoped, tag = 'internal scratch']
  %s0 = inlined_call_operand.hbm [shape: f32[3,128], index: 0, kind: input, shape index: {}]
  %s1 = inlined_call_operand.hbm [shape: f32[3,32], index: 1, kind: input, shape index: {}]
  %s2 = inlined_call_operand.hbm [shape: f32[128,256], index: 2, kind: input, shape index: {}]
  %s3 = inlined_call_operand.hbm [shape: f32[32,256], index: 3, kind: input, shape index: {}]
  %s4 = inlined_call_operand.vmem [shape: f32[1,256], index: 4, kind: input, shape index: {}]
  %s5 = inlined_call_operand.hbm [shape: f32[3,256], index: 5, kind: output, shape index: {}]
  %s6 = sld [smem:[#allocation0]]
  $region46: #{tpu_custom_call.1} parent=0
    _
  %s8 = ssub.s32 1, %s6
  %s9 = scalar_select 0, %s8, %s6
  $region1: #{tpu_custom_call.1} parent=0
    #allocation2 [shape = 'u8[2048]{0}', space=vmem, size = 0x800, scoped, tag = 'input window, operand 0, single buffered']
    #allocation3 [shape = 's32[1]{0}', space=sflag, size = 0x4, scoped, tag = 'scoped memory for tpu_custom_call.1']
    #allocation4 [shape = 's32[1]{0}', space=sflag, size = 0x4, scoped, tag = 'scoped memory for tpu_custom_call.1']
    #allocation5 [shape = 'u8[2048]{0}', space=vmem, size = 0x800, scoped, tag = 'input window, operand 1, single buffered']
    #allocation6 [shape = 's32[1]{0}', space=sflag, size = 0x4, scoped, tag = 'scoped memory for tpu_custom_call.1']
    #allocation7 [shape = 'u8[131072]{0}', space=vmem, size = 0x20000, scoped, tag = 'input window, operand 2, single buffered']
    #allocation8 [shape = 'u8[32768]{0}', space=vmem, size = 0x8000, scoped, tag = 'input window, operand 3, single buffered']
    #allocation9 [shape = 's32[1]{0}', space=sflag, size = 0x4, scoped, tag = 'scoped memory for tpu_custom_call.1']
    #allocation10 [shape = 'u8[4096]{0}', space=vmem, size = 0x1000, scoped, tag = 'output window, operand 0, single buffered']
    %10 = vsyncpa [#allocation3], 0
    %11 = vsyncpa [#allocation6], 0
    %12 = vsyncpa [#allocation9], 0
    %13 = vsyncpa [#allocation4], 0
    // Predicated region
    $region2: #{tpu_custom_call.1} parent=1 // pred_check
      _
    $region3: #{tpu_custom_call.1} parent=1 // pred_check_branch
      %15 = sbr.rel (0) target = $region5
    $region4: #{tpu_custom_call.1} parent=1 // pred_region
      %17 = vsyncadd [#allocation3], 0
      %s19 = sshll.u32 %s0, 4
      %s20 = int_to_ptr.hbm [resolvable:$true] %s19
      %s21 = sshll.u32 [#allocation2], 4
      %s22 = int_to_ptr.vmem [resolvable:$true] %s21
      %24 = dma.hbm_to_vmem [thread:$0]  %s20, 64, %s22, [#allocation3]
    $region5: #{tpu_custom_call.1} parent=1 // pred_fallthru
      _
    // Predicated region
    $region6: #{tpu_custom_call.1} parent=1 // pred_check
      _
    $region7: #{tpu_custom_call.1} parent=1 // pred_check_branch
      %26 = sbr.rel (0) target = $region9
    $region8: #{tpu_custom_call.1} parent=1 // pred_region
      %28 = vsyncadd [#allocation6], 0
      %s30 = sshll.u32 %s1, 4
      %s31 = int_to_ptr.hbm [resolvable:$true] %s30
      %s32 = sshll.u32 [#allocation5], 4
      %s33 = int_to_ptr.vmem [resolvable:$true] %s32
      %35 = dma.hbm_to_vmem [thread:$0]  %s31, 64, %s33, [#allocation6]
    $region9: #{tpu_custom_call.1} parent=1 // pred_fallthru
      _
    // Predicated region
    $region10: #{tpu_custom_call.1} parent=1 // pred_check
      _
    $region11: #{tpu_custom_call.1} parent=1 // pred_check_branch
      %37 = sbr.rel (0) target = $region13
    $region12: #{tpu_custom_call.1} parent=1 // pred_region
      %39 = vsyncadd [#allocation6], 0
      %s40 = sshll.u32 %s2, 4
      %s41 = int_to_ptr.hbm [resolvable:$true] %s40
      %s42 = sshll.u32 [#allocation7], 4
      %s43 = int_to_ptr.vmem [resolvable:$true] %s42
      %48 = dma.hbm_to_vmem [thread:$0]  %s41, 4096, %s43, [#allocation6], 256, 256, 16
    $region13: #{tpu_custom_call.1} parent=1 // pred_fallthru
      _
    // Predicated region
    $region14: #{tpu_custom_call.1} parent=1 // pred_check
      _
    $region15: #{tpu_custom_call.1} parent=1 // pred_check_branch
      %50 = sbr.rel (0) target = $region17
    $region16: #{tpu_custom_call.1} parent=1 // pred_region
      %52 = vsyncadd [#allocation9], 0
      %s53 = sshll.u32 %s3, 4
      %s54 = int_to_ptr.hbm [resolvable:$true] %s53
      %s55 = sshll.u32 [#allocation8], 4
      %s56 = int_to_ptr.vmem [resolvable:$true] %s55
      %61 = dma.hbm_to_vmem [thread:$0]  %s54, 1024, %s56, [#allocation9], 256, 256, 16
    $region17: #{tpu_custom_call.1} parent=1 // pred_fallthru
      _
    // Predicated region
    $region18: #{tpu_custom_call.1} parent=1 // pred_check
      _
    $region19: #{tpu_custom_call.1} parent=1 // pred_check_branch
      %63 = sbr.rel (0) target = $region21
    $region20: #{tpu_custom_call.1} parent=1 // pred_region
      _
    $region21: #{tpu_custom_call.1} parent=1 // pred_fallthru
      _
    // Predicated region
    $region22: #{tpu_custom_call.1} parent=1 // pred_check
      _
    $region23: #{tpu_custom_call.1} parent=1 // pred_check_branch
      %65 = sbr.rel (0) target = $region25
    $region24: #{tpu_custom_call.1} parent=1 // pred_region
      %67 = dma.done [#allocation3], 64
    $region25: #{tpu_custom_call.1} parent=1 // pred_fallthru
      _
    // Predicated region
    $region26: #{tpu_custom_call.1} parent=1 // pred_check
      _
    $region27: #{tpu_custom_call.1} parent=1 // pred_check_branch
      %69 = sbr.rel (0) target = $region29
    $region28: #{tpu_custom_call.1} parent=1 // pred_region
      %71 = dma.done [#allocation6], 64
    $region29: #{tpu_custom_call.1} parent=1 // pred_fallthru
      _
    // Predicated region
    $region30: #{tpu_custom_call.1} parent=1 // pred_check
      _
    $region31: #{tpu_custom_call.1} parent=1 // pred_check_branch
      %73 = sbr.rel (0) target = $region33
    $region32: #{tpu_custom_call.1} parent=1 // pred_region
      %75 = dma.done [#allocation6], 4096
    $region33: #{tpu_custom_call.1} parent=1 // pred_fallthru
      _
    // Predicated region
    $region34: #{tpu_custom_call.1} parent=1 // pred_check
      _
    $region35: #{tpu_custom_call.1} parent=1 // pred_check_branch
      %77 = sbr.rel (0) target = $region37
    $region36: #{tpu_custom_call.1} parent=1 // pred_region
      %79 = dma.done [#allocation9], 1024
    $region37: #{tpu_custom_call.1} parent=1 // pred_fallthru
      _
    %v80 = vld [vmem:[#allocation2] sm:$0x7]
    %v81 = vld [vmem:[#allocation7] sm:$0xff]
    %v82 = vld [vmem:[#allocation7 + $0x8] sm:$0xff]
    %v83 = vld [vmem:[#allocation7 + $0x10] sm:$0xff]
    %v84 = vld [vmem:[#allocation7 + $0x18] sm:$0xff]
    %v85 = vld [vmem:[#allocation7 + $0x20] sm:$0xff]
    %v86 = vld [vmem:[#allocation7 + $0x28] sm:$0xff]
    %v87 = vld [vmem:[#allocation7 + $0x30] sm:$0xff]
    %v88 = vld [vmem:[#allocation7 + $0x38] sm:$0xff]
    %v89 = vld [vmem:[#allocation7 + $0x40] sm:$0xff]
    %v90 = vld [vmem:[#allocation7 + $0x48] sm:$0xff]
    %v91 = vld [vmem:[#allocation7 + $0x50] sm:$0xff]
    %v92 = vld [vmem:[#allocation7 + $0x58] sm:$0xff]
    %v93 = vld [vmem:[#allocation7 + $0x60] sm:$0xff]
    %v94 = vld [vmem:[#allocation7 + $0x68] sm:$0xff]
    %v95 = vld [vmem:[#allocation7 + $0x70] sm:$0xff]
    %v96 = vld [vmem:[#allocation7 + $0x78] sm:$0xff]
    %v97 = vld [vmem:[#allocation7 + $0x80] sm:$0xff]
    %v98 = vld [vmem:[#allocation7 + $0x88] sm:$0xff]
    %v99 = vld [vmem:[#allocation7 + $0x90] sm:$0xff]
    %v100 = vld [vmem:[#allocation7 + $0x98] sm:$0xff]
    %v101 = vld [vmem:[#allocation7 + $0xa0] sm:$0xff]
    %v102 = vld [vmem:[#allocation7 + $0xa8] sm:$0xff]
    %v103 = vld [vmem:[#allocation7 + $0xb0] sm:$0xff]
    %v104 = vld [vmem:[#allocation7 + $0xb8] sm:$0xff]
    %v105 = vld [vmem:[#allocation7 + $0xc0] sm:$0xff]
    %v106 = vld [vmem:[#allocation7 + $0xc8] sm:$0xff]
    %v107 = vld [vmem:[#allocation7 + $0xd0] sm:$0xff]
    %v108 = vld [vmem:[#allocation7 + $0xd8] sm:$0xff]
    %v109 = vld [vmem:[#allocation7 + $0xe0] sm:$0xff]
    %v110 = vld [vmem:[#allocation7 + $0xe8] sm:$0xff]
    %v111 = vld [vmem:[#allocation7 + $0xf0] sm:$0xff]
    %v112 = vld [vmem:[#allocation7 + $0xf8] sm:$0xff]
    %v113 = vld [vmem:[#allocation5] sm:$0x7]
    %v114 = vld [vmem:[#allocation8] sm:$0xff]
    %v115 = vld [vmem:[#allocation8 + $0x8] sm:$0xff]
    %v116 = vld [vmem:[#allocation8 + $0x10] sm:$0xff]
    %v117 = vld [vmem:[#allocation8 + $0x18] sm:$0xff]
    %v118 = vld [vmem:[#allocation8 + $0x20] sm:$0xff]
    %v119 = vld [vmem:[#allocation8 + $0x28] sm:$0xff]
    %v120 = vld [vmem:[#allocation8 + $0x30] sm:$0xff]
    %v121 = vld [vmem:[#allocation8 + $0x38] sm:$0xff]
    %vm122 = vcmask 261120
    %v124 = vsel %vm122, %v113, 0
    %126 = vmatpush.msra.mxu0 0.0
    %127 = vmatpush.msra.mxu0 0.0
    %128 = vmatpush.msra.mxu0 0.0
    %129 = vmatpush.msra.mxu0 0.0
    %130 = vmatpush.msra.mxu0 0.0
    %131 = vmatpush.msra.mxu0 0.0
    %132 = vmatpush.msra.mxu0 0.0
    %133 = vmatpush.msra.mxu0 0.0
    %134 = vmatpush.msra.mxu0 0.0
    %135 = vmatpush.msra.mxu0 0.0
    %136 = vmatpush.msra.mxu0 0.0
    %137 = vmatpush.msra.mxu0 0.0
    %138 = vmatpush.msra.mxu0 %v120
    %139 = vmatpush.msra.mxu0 %v118
    %140 = vmatpush.msra.mxu0 %v116
    %141 = vmatpush.msra.mxu0 %v114
    %142 = vmatmul.f32.gmra.mxu0 %v124
    %v143 = vpop.f32.mrf.mxu0
    %v144 = vadd.f32 0.0, %v143
    %145 = vdwg.mxu0
    %146 = vmatpush.msra.mxu0 0.0
    %147 = vmatpush.msra.mxu0 0.0
    %148 = vmatpush.msra.mxu0 0.0
    %149 = vmatpush.msra.mxu0 0.0
    %150 = vmatpush.msra.mxu0 0.0
    %151 = vmatpush.msra.mxu0 0.0
    %152 = vmatpush.msra.mxu0 0.0
    %153 = vmatpush.msra.mxu0 0.0
    %154 = vmatpush.msra.mxu0 0.0
    %155 = vmatpush.msra.mxu0 0.0
    %156 = vmatpush.msra.mxu0 0.0
    %157 = vmatpush.msra.mxu0 0.0
    %158 = vmatpush.msra.mxu0 %v121
    %159 = vmatpush.msra.mxu0 %v119
    %160 = vmatpush.msra.mxu0 %v117
    %161 = vmatpush.msra.mxu0 %v115
    %162 = vmatmul.f32.gmra.mxu0 %v124
    %v163 = vpop.f32.mrf.mxu0
    %v164 = vadd.f32 0.0, %v163
    %165 = vdwg.mxu0
    %166 = vmatpush.msra.mxu0 %v111
    %167 = vmatpush.msra.mxu0 %v109
    %168 = vmatpush.msra.mxu0 %v107
    %169 = vmatpush.msra.mxu0 %v105
    %170 = vmatpush.msra.mxu0 %v103
    %171 = vmatpush.msra.mxu0 %v101
    %172 = vmatpush.msra.mxu0 %v99
    %173 = vmatpush.msra.mxu0 %v97
    %174 = vmatpush.msra.mxu0 %v95
    %175 = vmatpush.msra.mxu0 %v93
    %176 = vmatpush.msra.mxu0 %v91
    %177 = vmatpush.msra.mxu0 %v89
    %178 = vmatpush.msra.mxu0 %v87
    %179 = vmatpush.msra.mxu0 %v85
    %180 = vmatpush.msra.mxu0 %v83
    %181 = vmatpush.msra.mxu0 %v81
    %182 = vmatmul.f32.gmra.mxu0 %v80
    %v183 = vpop.f32.mrf.mxu0
    %v184 = vadd.f32 %v144, %v183
    %185 = vdwg.mxu0
    %186 = vmatpush.msra.mxu0 %v112
    %187 = vmatpush.msra.mxu0 %v110
    %188 = vmatpush.msra.mxu0 %v108
    %189 = vmatpush.msra.mxu0 %v106
    %190 = vmatpush.msra.mxu0 %v104
    %191 = vmatpush.msra.mxu0 %v102
    %192 = vmatpush.msra.mxu0 %v100
    %193 = vmatpush.msra.mxu0 %v98
    %194 = vmatpush.msra.mxu0 %v96
    %195 = vmatpush.msra.mxu0 %v94
    %196 = vmatpush.msra.mxu0 %v92
    %197 = vmatpush.msra.mxu0 %v90
    %198 = vmatpush.msra.mxu0 %v88
    %199 = vmatpush.msra.mxu0 %v86
    %200 = vmatpush.msra.mxu0 %v84
    %201 = vmatpush.msra.mxu0 %v82
    %202 = vmatmul.f32.gmra.mxu0 %v80
    %v203 = vpop.f32.mrf.mxu0
    %v204 = vadd.f32 %v164, %v203
    %205 = vdwg.mxu0
    %v206 = vld [vmem:[%s4] sm:$0x3]
    %v208 = vperm.slane %v206, 0
    %v209 = vperm.slane %v206, 1
    %v212 = vadd.f32 %v184, %v208
    %v213 = vadd.f32 %v204, %v209
    %vm214 = vcmp.ge.f32.partialorder %v212, 0.0
    %vm215 = vcmp.ge.f32.partialorder %v213, 0.0
    %v216 = vmul.f32 %v212, 0.01
    %v217 = vmul.f32 %v213, 0.01
    %v218 = vsel %vm214, %v212, %v216
    %v219 = vsel %vm215, %v213, %v217
    %v222 = vrot.slane %v219, 4
    %vm223 = vcmask 1043456
    %v224 = vsel %vm223, %v218, %v222
    %226 = vst [vmem:[#allocation10] sm:$0x77] %v224
    // Predicated region
    $region38: #{tpu_custom_call.1} parent=1 // pred_check
      _
    $region39: #{tpu_custom_call.1} parent=1 // pred_check_branch
      %228 = sbr.rel (0) target = $region41
    $region40: #{tpu_custom_call.1} parent=1 // pred_region
      %230 = vsyncadd [#allocation4], 0
      %s232 = sshll.u32 [#allocation10], 4
      %s233 = int_to_ptr.vmem [resolvable:$true] %s232
      %s234 = sshll.u32 %s5, 4
      %s235 = int_to_ptr.hbm [resolvable:$true] %s234
      %237 = dma.vmem_to_hbm [thread:$0]  %s233, 128, %s235, [#allocation4]
    $region41: #{tpu_custom_call.1} parent=1 // pred_fallthru
      _
    // Predicated region
    $region42: #{tpu_custom_call.1} parent=1 // pred_check
      _
    $region43: #{tpu_custom_call.1} parent=1 // pred_check_branch
      %239 = sbr.rel (0) target = $region45
    $region44: #{tpu_custom_call.1} parent=1 // pred_region
      %241 = dma.done [#allocation4], 128
    $region45: #{tpu_custom_call.1} parent=1 // pred_fallthru
      _
    %242 = vsyncpa [#allocation3], 1
    %243 = vsyncpa [#allocation6], 1
    %244 = vsyncpa [#allocation9], 1
    %245 = vsyncpa [#allocation4], 1

</llo_original>
